<compile_context>
chip_gen: v7x
topology: tpu7x:2x2x1
jax: 0.10.0
libtpu: 0.0.40
codegen_flags: <defaults>
</compile_context>

<pallas_src>
import jax
import jax.numpy as jnp
from jax.experimental import pallas as pl
from jax.experimental.pallas import tpu as pltpu

# 4 arrays (Q, K, V, out) x 2 pipeline buffers per block must fit this budget.
_VMEM_BLOCK_BUDGET_BYTES = 16 * 1024 * 1024
_VMEM_LIMIT_BYTES = 32 * 1024 * 1024


def _attn_kernel(q_ref, k_ref, v_ref, o_ref):
    # Each ref is a (TB, L, D) VMEM tile covering TB independent (batch, head)
    # slabs; L and D are full-extent block dims.
    q = q_ref[...]
    k = k_ref[...]
    v = v_ref[...]

    # Sum-of-squares reductions accumulate in f32 regardless of input dtype.
    qf = q.astype(jnp.float32)
    kf = k.astype(jnp.float32)
    inv_qn = jax.lax.rsqrt(jnp.sum(qf * qf, axis=-1, keepdims=True))
    inv_kn = jax.lax.rsqrt(jnp.sum(kf * kf, axis=-1, keepdims=True))

    if q.dtype == jnp.bfloat16:
        # bf16-native VPU path (v6e/v7x): keep broadcast multiplies in bf16 to
        # halve vreg/VMEM pressure; kv reduction still accumulates in f32.
        q_n = q * inv_qn.astype(jnp.bfloat16)
        k_n = k * inv_kn.astype(jnp.bfloat16)
        kv = jnp.sum((k_n * v).astype(jnp.float32), axis=-2, keepdims=True)
        o_ref[...] = (q_n.astype(jnp.float32) * kv).astype(o_ref.dtype)
    else:
        # f32 path (also used on v5e, which has no bf16 VPU).
        q_n = qf * inv_qn
        k_n = kf * inv_kn
        kv = jnp.sum(k_n * v.astype(jnp.float32), axis=-2, keepdims=True)
        o_ref[...] = (q_n * kv).astype(o_ref.dtype)


def scaled_dot_product_attention(Q, K, V):
    """Q, K, V: (B, H, L, D) -> att: (B, H, L, D)."""
    B, H, L, D = Q.shape
    BH = B * H
    qf = Q.reshape(BH, L, D)
    kf = K.reshape(BH, L, D)
    vf = V.reshape(BH, L, D)

    # Pick TB so 4 arrays x 2 pipeline buffers x (TB * L * D * itemsize) fits
    # the VMEM budget. Each (batch, head) slab is independent, so any TB is
    # correct; Pallas masks the (possibly partial) trailing block.
    slab_bytes = L * D * Q.dtype.itemsize
    tb_cap = max(1, _VMEM_BLOCK_BUDGET_BYTES // (8 * slab_bytes))
    TB = min(BH, tb_cap)

    spec = pl.BlockSpec((TB, L, D), lambda i: (i, 0, 0))

    out = pl.pallas_call(
        _attn_kernel,
        out_shape=jax.ShapeDtypeStruct((BH, L, D), Q.dtype),
        grid_spec=pl.GridSpec(
            grid=(pl.cdiv(BH, TB),),
            in_specs=[spec, spec, spec],
            out_specs=spec,
        ),
        compiler_params=pltpu.CompilerParams(
            dimension_semantics=("parallel",),
            vmem_limit_bytes=_VMEM_LIMIT_BYTES,
        ),
    )(qf, kf, vf)

    return out.reshape(B, H, L, D)


def _reference(Q, K, V):
    q = Q / jnp.linalg.norm(Q, axis=-1, keepdims=True)
    k = K / jnp.linalg.norm(K, axis=-1, keepdims=True)
    kv = jnp.sum(k * V, axis=-2, keepdims=True)
    return q * kv


if __name__ == "__main__":
    B, H, L, D = 2, 4, 8, 32
    key = jax.random.PRNGKey(0)
    kq, kk, kv_ = jax.random.split(key, 3)
    Q = jax.random.normal(kq, (B, H, L, D), dtype=jnp.float32)
    K = jax.random.normal(kk, (B, H, L, D), dtype=jnp.float32)
    V = jax.random.normal(kv_, (B, H, L, D), dtype=jnp.float32)

    att = scaled_dot_product_attention(Q, K, V)
    jax.block_until_ready(att)

    ref = _reference(Q, K, V)
    assert att.shape == (B, H, L, D)
    assert jnp.allclose(att, ref, atol=1e-5, rtol=1e-5), "mismatch vs reference"
    print("KERNEL_OK")
</pallas_src>

<mosaic_0001>
module attributes {stable_mosaic.version = 11 : i64} {
  func.func @_attn_kernel(%arg0: i32, %arg1: memref<8x8x32xf32, #tpu.memory_space<vmem>>, %arg2: memref<8x8x32xf32, #tpu.memory_space<vmem>>, %arg3: memref<8x8x32xf32, #tpu.memory_space<vmem>>, %arg4: memref<8x8x32xf32, #tpu.memory_space<vmem>>) attributes {dimension_semantics = [#tpu.dimension_semantics<parallel>], iteration_bounds = array<i64: 1>, scalar_prefetch = 0 : i64, scratch_operands = 0 : i64, tpu.core_type = #tpu.core_type<tc>, window_params = [{transform_indices = @transform_0, window_bounds = array<i64: 8, 8, 32>}, {transform_indices = @transform_1, window_bounds = array<i64: 8, 8, 32>}, {transform_indices = @transform_2, window_bounds = array<i64: 8, 8, 32>}, {transform_indices = @transform_3, window_bounds = array<i64: 8, 8, 32>}]} {
    %c0 = arith.constant 0 : index
    %c0_0 = arith.constant 0 : index
    %c0_1 = arith.constant 0 : index
    %0 = vector.load %arg1[%c0, %c0_0, %c0_1] : memref<8x8x32xf32, #tpu.memory_space<vmem>>, vector<8x8x32xf32>
    %c0_2 = arith.constant 0 : index
    %c0_3 = arith.constant 0 : index
    %c0_4 = arith.constant 0 : index
    %1 = vector.load %arg2[%c0_2, %c0_3, %c0_4] : memref<8x8x32xf32, #tpu.memory_space<vmem>>, vector<8x8x32xf32>
    %c0_5 = arith.constant 0 : index
    %c0_6 = arith.constant 0 : index
    %c0_7 = arith.constant 0 : index
    %2 = vector.load %arg3[%c0_5, %c0_6, %c0_7] : memref<8x8x32xf32, #tpu.memory_space<vmem>>, vector<8x8x32xf32>
    %3 = arith.mulf %0, %0 : vector<8x8x32xf32>
    %cst = arith.constant dense<0.000000e+00> : vector<8x8xf32>
    %4 = vector.multi_reduction <add>, %3, %cst [2] : vector<8x8x32xf32> to vector<8x8xf32>
    %5 = vector.shape_cast %4 : vector<8x8xf32> to vector<8x8x1xf32>
    %6 = math.rsqrt %5 : vector<8x8x1xf32>
    %7 = arith.mulf %1, %1 : vector<8x8x32xf32>
    %cst_8 = arith.constant dense<0.000000e+00> : vector<8x8xf32>
    %8 = vector.multi_reduction <add>, %7, %cst_8 [2] : vector<8x8x32xf32> to vector<8x8xf32>
    %9 = vector.shape_cast %8 : vector<8x8xf32> to vector<8x8x1xf32>
    %10 = math.rsqrt %9 : vector<8x8x1xf32>
    %11 = vector.broadcast %6 : vector<8x8x1xf32> to vector<8x8x32xf32>
    %12 = arith.mulf %0, %11 : vector<8x8x32xf32>
    %13 = vector.broadcast %10 : vector<8x8x1xf32> to vector<8x8x32xf32>
    %14 = arith.mulf %1, %13 : vector<8x8x32xf32>
    %15 = arith.mulf %14, %2 : vector<8x8x32xf32>
    %cst_9 = arith.constant dense<0.000000e+00> : vector<8x32xf32>
    %16 = vector.multi_reduction <add>, %15, %cst_9 [1] : vector<8x8x32xf32> to vector<8x32xf32>
    %17 = vector.shape_cast %16 : vector<8x32xf32> to vector<8x1x32xf32>
    %18 = vector.broadcast %17 : vector<8x1x32xf32> to vector<8x8x32xf32>
    %19 = arith.mulf %12, %18 : vector<8x8x32xf32>
    %c0_10 = arith.constant 0 : index
    %c0_11 = arith.constant 0 : index
    %c0_12 = arith.constant 0 : index
    %20 = vector.load %arg4[%c0_10, %c0_11, %c0_12] : memref<8x8x32xf32, #tpu.memory_space<vmem>>, vector<8x8x32xf32>
    tpu.vector_store %arg4[%c0_10, %c0_11, %c0_12], %19 {strides = array<i32>} : memref<8x8x32xf32, #tpu.memory_space<vmem>>, vector<8x8x32xf32>,
    return
  }
  func.func @transform_0(%arg0: i32) -> (i32, i32, i32) {
    %c0_i32 = arith.constant 0 : i32
    %c0_i32_0 = arith.constant 0 : i32
    %c0_i32_1 = arith.constant 0 : i32
    return %arg0, %c0_i32, %c0_i32_0 : i32, i32, i32
  }
  func.func @transform_1(%arg0: i32) -> (i32, i32, i32) {
    %c0_i32 = arith.constant 0 : i32
    %c0_i32_0 = arith.constant 0 : i32
    %c0_i32_1 = arith.constant 0 : i32
    return %arg0, %c0_i32, %c0_i32_0 : i32, i32, i32
  }
  func.func @transform_2(%arg0: i32) -> (i32, i32, i32) {
    %c0_i32 = arith.constant 0 : i32
    %c0_i32_0 = arith.constant 0 : i32
    %c0_i32_1 = arith.constant 0 : i32
    return %arg0, %c0_i32, %c0_i32_0 : i32, i32, i32
  }
  func.func @transform_3(%arg0: i32) -> (i32, i32, i32) {
    %c0_i32 = arith.constant 0 : i32
    %c0_i32_0 = arith.constant 0 : i32
    %c0_i32_1 = arith.constant 0 : i32
    return %arg0, %c0_i32, %c0_i32_0 : i32, i32, i32
  }
}

</mosaic_0001>

<llo_original>
// kernel: tpu_custom_call.1
$region0: #{tpu_custom_call.1}
  #allocation0 [shape = 'u32[]', space=smem, size = 0x4, offset = 0x4, fixed_abs, tag = 'smem constant byte address 0x4 - core index']
  #allocation1 [shape = 'u32[144,128]{1,0:T(1,128)}', space=vmem, size = 0x12000, scoped, tag = 'internal scratch']
  %s0 = inlined_call_operand.hbm [shape: f32[8,8,32], index: 0, kind: input, shape index: {}]
  %s1 = inlined_call_operand.hbm [shape: f32[8,8,32], index: 1, kind: input, shape index: {}]
  %s2 = inlined_call_operand.hbm [shape: f32[8,8,32], index: 2, kind: input, shape index: {}]
  %s3 = inlined_call_operand.hbm [shape: f32[8,8,32], index: 3, kind: output, shape index: {}]
  %s4 = sld [smem:[#allocation0]]
  $region34: #{tpu_custom_call.1} parent=0
    _
  %s6 = ssub.s32 1, %s4
  %s7 = scalar_select 0, %s6, %s4
  $region1: #{tpu_custom_call.1} parent=0
    #allocation2 [shape = 'u8[32768]{0}', space=vmem, size = 0x8000, scoped, tag = 'input window, operand 0, single buffered']
    #allocation3 [shape = 's32[1]{0}', space=sflag, size = 0x4, scoped, tag = 'scoped memory for tpu_custom_call.1']
    #allocation4 [shape = 's32[1]{0}', space=sflag, size = 0x4, scoped, tag = 'scoped memory for tpu_custom_call.1']
    #allocation5 [shape = 'u8[32768]{0}', space=vmem, size = 0x8000, scoped, tag = 'input window, operand 1, single buffered']
    #allocation6 [shape = 's32[1]{0}', space=sflag, size = 0x4, scoped, tag = 'scoped memory for tpu_custom_call.1']
    #allocation7 [shape = 'u8[32768]{0}', space=vmem, size = 0x8000, scoped, tag = 'input window, operand 2, single buffered']
    #allocation8 [shape = 'u8[32768]{0}', space=vmem, size = 0x8000, scoped, tag = 'output window, operand 0, single buffered']
    %8 = vsyncpa [#allocation3], 0
    %9 = vsyncpa [#allocation6], 0
    %10 = vsyncpa [#allocation4], 0
    // Predicated region
    $region2: #{tpu_custom_call.1} parent=1 // pred_check
      _
    $region3: #{tpu_custom_call.1} parent=1 // pred_check_branch
      %12 = sbr.rel (0) target = $region5
    $region4: #{tpu_custom_call.1} parent=1 // pred_region
      %s14 = ssub.s32 1024, 1024
      %15 = vsyncadd [#allocation3], %s14
      %s16 = sshll.u32 [#allocation2], 4
      %s17 = int_to_ptr.vmem [resolvable:$true] %s16
      %22 = dma.hbm_to_vmem [thread:$0]  %s0, 1024, %s17, [#allocation3], 128, 128, 8
    $region5: #{tpu_custom_call.1} parent=1 // pred_fallthru
      _
    // Predicated region
    $region6: #{tpu_custom_call.1} parent=1 // pred_check
      _
    $region7: #{tpu_custom_call.1} parent=1 // pred_check_branch
      %24 = sbr.rel (0) target = $region9
    $region8: #{tpu_custom_call.1} parent=1 // pred_region
      %s26 = ssub.s32 1024, 1024
      %27 = vsyncadd [#allocation6], %s26
      %s28 = sshll.u32 [#allocation5], 4
      %s29 = int_to_ptr.vmem [resolvable:$true] %s28
      %34 = dma.hbm_to_vmem [thread:$0]  %s1, 1024, %s29, [#allocation6], 128, 128, 8
    $region9: #{tpu_custom_call.1} parent=1 // pred_fallthru
      _
    // Predicated region
    $region10: #{tpu_custom_call.1} parent=1 // pred_check
      _
    $region11: #{tpu_custom_call.1} parent=1 // pred_check_branch
      %36 = sbr.rel (0) target = $region13
    $region12: #{tpu_custom_call.1} parent=1 // pred_region
      %s38 = ssub.s32 1024, 1024
      %39 = vsyncadd [#allocation6], %s38
      %s40 = sshll.u32 [#allocation7], 4
      %s41 = int_to_ptr.vmem [resolvable:$true] %s40
      %46 = dma.hbm_to_vmem [thread:$0]  %s2, 1024, %s41, [#allocation6], 128, 128, 8
    $region13: #{tpu_custom_call.1} parent=1 // pred_fallthru
      _
    // Predicated region
    $region14: #{tpu_custom_call.1} parent=1 // pred_check
      _
    $region15: #{tpu_custom_call.1} parent=1 // pred_check_branch
      %48 = sbr.rel (0) target = $region17
    $region16: #{tpu_custom_call.1} parent=1 // pred_region
      %49 = dma.done [#allocation3], 1024
    $region17: #{tpu_custom_call.1} parent=1 // pred_fallthru
      _
    // Predicated region
    $region18: #{tpu_custom_call.1} parent=1 // pred_check
      _
    $region19: #{tpu_custom_call.1} parent=1 // pred_check_branch
      %51 = sbr.rel (0) target = $region21
    $region20: #{tpu_custom_call.1} parent=1 // pred_region
      %52 = dma.done [#allocation6], 1024
    $region21: #{tpu_custom_call.1} parent=1 // pred_fallthru
      _
    // Predicated region
    $region22: #{tpu_custom_call.1} parent=1 // pred_check
      _
    $region23: #{tpu_custom_call.1} parent=1 // pred_check_branch
      %54 = sbr.rel (0) target = $region25
    $region24: #{tpu_custom_call.1} parent=1 // pred_region
      %55 = dma.done [#allocation6], 1024
    $region25: #{tpu_custom_call.1} parent=1 // pred_fallthru
      _
    %v56 = vld [vmem:[#allocation2] sm:$0xff]
    %v57 = vld [vmem:[#allocation2 + $0x8] sm:$0xff]
    %v58 = vld [vmem:[#allocation2 + $0x10] sm:$0xff]
    %v59 = vld [vmem:[#allocation2 + $0x18] sm:$0xff]
    %v60 = vld [vmem:[#allocation2 + $0x20] sm:$0xff]
    %v61 = vld [vmem:[#allocation2 + $0x28] sm:$0xff]
    %v62 = vld [vmem:[#allocation2 + $0x30] sm:$0xff]
    %v63 = vld [vmem:[#allocation2 + $0x38] sm:$0xff]
    %v64 = vld [vmem:[#allocation5] sm:$0xff]
    %v65 = vld [vmem:[#allocation5 + $0x8] sm:$0xff]
    %v66 = vld [vmem:[#allocation5 + $0x10] sm:$0xff]
    %v67 = vld [vmem:[#allocation5 + $0x18] sm:$0xff]
    %v68 = vld [vmem:[#allocation5 + $0x20] sm:$0xff]
    %v69 = vld [vmem:[#allocation5 + $0x28] sm:$0xff]
    %v70 = vld [vmem:[#allocation5 + $0x30] sm:$0xff]
    %v71 = vld [vmem:[#allocation5 + $0x38] sm:$0xff]
    %v72 = vld [vmem:[#allocation7] sm:$0xff]
    %v73 = vld [vmem:[#allocation7 + $0x8] sm:$0xff]
    %v74 = vld [vmem:[#allocation7 + $0x10] sm:$0xff]
    %v75 = vld [vmem:[#allocation7 + $0x18] sm:$0xff]
    %v76 = vld [vmem:[#allocation7 + $0x20] sm:$0xff]
    %v77 = vld [vmem:[#allocation7 + $0x28] sm:$0xff]
    %v78 = vld [vmem:[#allocation7 + $0x30] sm:$0xff]
    %v79 = vld [vmem:[#allocation7 + $0x38] sm:$0xff]
    %v80 = vmul.f32 %v56, %v56
    %v81 = vmul.f32 %v57, %v57
    %v82 = vmul.f32 %v58, %v58
    %v83 = vmul.f32 %v59, %v59
    %v84 = vmul.f32 %v60, %v60
    %v85 = vmul.f32 %v61, %v61
    %v86 = vmul.f32 %v62, %v62
    %v87 = vmul.f32 %v63, %v63
    %vm88 = vcmask 261120
    %v89 = vsel %vm88, %v80, 0.0
    %90 = vadd.xlane.f32.xlu0 %v89
    %v91 = vpop.xlane.xlu0 %90
    %v92 = vsel %vm88, %v81, 0.0
    %93 = vadd.xlane.f32.xlu0 %v92
    %v94 = vpop.xlane.xlu0 %93
    %v95 = vsel %vm88, %v82, 0.0
    %96 = vadd.xlane.f32.xlu0 %v95
    %v97 = vpop.xlane.xlu0 %96
    %v98 = vsel %vm88, %v83, 0.0
    %99 = vadd.xlane.f32.xlu0 %v98
    %v100 = vpop.xlane.xlu0 %99
    %v101 = vsel %vm88, %v84, 0.0
    %102 = vadd.xlane.f32.xlu0 %v101
    %v103 = vpop.xlane.xlu0 %102
    %v104 = vsel %vm88, %v85, 0.0
    %105 = vadd.xlane.f32.xlu0 %v104
    %v106 = vpop.xlane.xlu0 %105
    %v107 = vsel %vm88, %v86, 0.0
    %108 = vadd.xlane.f32.xlu0 %v107
    %v109 = vpop.xlane.xlu0 %108
    %v110 = vsel %vm88, %v87, 0.0
    %111 = vadd.xlane.f32.xlu0 %v110
    %v112 = vpop.xlane.xlu0 %111
    %v113 = vrsqrt.pop %v91
    %v114 = vrsqrt.pop %v94
    %v115 = vrsqrt.pop %v97
    %v116 = vrsqrt.pop %v100
    %v117 = vrsqrt.pop %v103
    %v118 = vrsqrt.pop %v106
    %v119 = vrsqrt.pop %v109
    %v120 = vrsqrt.pop %v112
    %v121 = vmul.f32 %v64, %v64
    %v122 = vmul.f32 %v65, %v65
    %v123 = vmul.f32 %v66, %v66
    %v124 = vmul.f32 %v67, %v67
    %v125 = vmul.f32 %v68, %v68
    %v126 = vmul.f32 %v69, %v69
    %v127 = vmul.f32 %v70, %v70
    %v128 = vmul.f32 %v71, %v71
    %v129 = vsel %vm88, %v121, 0.0
    %130 = vadd.xlane.f32.xlu0 %v129
    %v131 = vpop.xlane.xlu0 %130
    %v132 = vsel %vm88, %v122, 0.0
    %133 = vadd.xlane.f32.xlu0 %v132
    %v134 = vpop.xlane.xlu0 %133
    %v135 = vsel %vm88, %v123, 0.0
    %136 = vadd.xlane.f32.xlu0 %v135
    %v137 = vpop.xlane.xlu0 %136
    %v138 = vsel %vm88, %v124, 0.0
    %139 = vadd.xlane.f32.xlu0 %v138
    %v140 = vpop.xlane.xlu0 %139
    %v141 = vsel %vm88, %v125, 0.0
    %142 = vadd.xlane.f32.xlu0 %v141
    %v143 = vpop.xlane.xlu0 %142
    %v144 = vsel %vm88, %v126, 0.0
    %145 = vadd.xlane.f32.xlu0 %v144
    %v146 = vpop.xlane.xlu0 %145
    %v147 = vsel %vm88, %v127, 0.0
    %148 = vadd.xlane.f32.xlu0 %v147
    %v149 = vpop.xlane.xlu0 %148
    %v150 = vsel %vm88, %v128, 0.0
    %151 = vadd.xlane.f32.xlu0 %v150
    %v152 = vpop.xlane.xlu0 %151
    %v153 = vrsqrt.pop %v131
    %v154 = vrsqrt.pop %v134
    %v155 = vrsqrt.pop %v137
    %v156 = vrsqrt.pop %v140
    %v157 = vrsqrt.pop %v143
    %v158 = vrsqrt.pop %v146
    %v159 = vrsqrt.pop %v149
    %v160 = vrsqrt.pop %v152
    %v161 = vmul.f32 %v56, %v113
    %v162 = vmul.f32 %v57, %v114
    %v163 = vmul.f32 %v58, %v115
    %v164 = vmul.f32 %v59, %v116
    %v165 = vmul.f32 %v60, %v117
    %v166 = vmul.f32 %v61, %v118
    %v167 = vmul.f32 %v62, %v119
    %v168 = vmul.f32 %v63, %v120
    %v169 = vmul.f32 %v64, %v153
    %v170 = vmul.f32 %v65, %v154
    %v171 = vmul.f32 %v66, %v155
    %v172 = vmul.f32 %v67, %v156
    %v173 = vmul.f32 %v68, %v157
    %v174 = vmul.f32 %v69, %v158
    %v175 = vmul.f32 %v70, %v159
    %v176 = vmul.f32 %v71, %v160
    %v177 = vmul.f32 %v169, %v72
    %v178 = vmul.f32 %v170, %v73
    %v179 = vmul.f32 %v171, %v74
    %v180 = vmul.f32 %v172, %v75
    %v181 = vmul.f32 %v173, %v76
    %v182 = vmul.f32 %v174, %v77
    %v183 = vmul.f32 %v175, %v78
    %v184 = vmul.f32 %v176, %v79
    %v185 = vsel %vm88, %v177, 0.0
    %v186 = vrot.slane %v185, 4
    %v187 = vadd.f32 %v185, %v186
    %v188 = vrot.slane %v187, 2
    %v189 = vadd.f32 %v187, %v188
    %v190 = vrot.slane %v189, 1
    %v191 = vadd.f32 %v189, %v190
    %v192 = vsel %vm88, %v178, 0.0
    %v193 = vrot.slane %v192, 4
    %v194 = vadd.f32 %v192, %v193
    %v195 = vrot.slane %v194, 2
    %v196 = vadd.f32 %v194, %v195
    %v197 = vrot.slane %v196, 1
    %v198 = vadd.f32 %v196, %v197
    %v199 = vsel %vm88, %v179, 0.0
    %v200 = vrot.slane %v199, 4
    %v201 = vadd.f32 %v199, %v200
    %v202 = vrot.slane %v201, 2
    %v203 = vadd.f32 %v201, %v202
    %v204 = vrot.slane %v203, 1
    %v205 = vadd.f32 %v203, %v204
    %v206 = vsel %vm88, %v180, 0.0
    %v207 = vrot.slane %v206, 4
    %v208 = vadd.f32 %v206, %v207
    %v209 = vrot.slane %v208, 2
    %v210 = vadd.f32 %v208, %v209
    %v211 = vrot.slane %v210, 1
    %v212 = vadd.f32 %v210, %v211
    %v213 = vsel %vm88, %v181, 0.0
    %v214 = vrot.slane %v213, 4
    %v215 = vadd.f32 %v213, %v214
    %v216 = vrot.slane %v215, 2
    %v217 = vadd.f32 %v215, %v216
    %v218 = vrot.slane %v217, 1
    %v219 = vadd.f32 %v217, %v218
    %v220 = vsel %vm88, %v182, 0.0
    %v221 = vrot.slane %v220, 4
    %v222 = vadd.f32 %v220, %v221
    %v223 = vrot.slane %v222, 2
    %v224 = vadd.f32 %v222, %v223
    %v225 = vrot.slane %v224, 1
    %v226 = vadd.f32 %v224, %v225
    %v227 = vsel %vm88, %v183, 0.0
    %v228 = vrot.slane %v227, 4
    %v229 = vadd.f32 %v227, %v228
    %v230 = vrot.slane %v229, 2
    %v231 = vadd.f32 %v229, %v230
    %v232 = vrot.slane %v231, 1
    %v233 = vadd.f32 %v231, %v232
    %v234 = vsel %vm88, %v184, 0.0
    %v235 = vrot.slane %v234, 4
    %v236 = vadd.f32 %v234, %v235
    %v237 = vrot.slane %v236, 2
    %v238 = vadd.f32 %v236, %v237
    %v239 = vrot.slane %v238, 1
    %v240 = vadd.f32 %v238, %v239
    %v241 = vmul.f32 %v161, %v191
    %v242 = vmul.f32 %v162, %v198
    %v243 = vmul.f32 %v163, %v205
    %v244 = vmul.f32 %v164, %v212
    %v245 = vmul.f32 %v165, %v219
    %v246 = vmul.f32 %v166, %v226
    %v247 = vmul.f32 %v167, %v233
    %v248 = vmul.f32 %v168, %v240
    %249 = vst.msk [vmem:[#allocation8] sm:$0xff] %vm88, %v241
    %250 = vst.msk [vmem:[#allocation8 + $0x8] sm:$0xff] %vm88, %v242
    %251 = vst.msk [vmem:[#allocation8 + $0x10] sm:$0xff] %vm88, %v243
    %252 = vst.msk [vmem:[#allocation8 + $0x18] sm:$0xff] %vm88, %v244
    %253 = vst.msk [vmem:[#allocation8 + $0x20] sm:$0xff] %vm88, %v245
    %254 = vst.msk [vmem:[#allocation8 + $0x28] sm:$0xff] %vm88, %v246
    %255 = vst.msk [vmem:[#allocation8 + $0x30] sm:$0xff] %vm88, %v247
    %256 = vst.msk [vmem:[#allocation8 + $0x38] sm:$0xff] %vm88, %v248
    // Predicated region
    $region26: #{tpu_custom_call.1} parent=1 // pred_check
      _
    $region27: #{tpu_custom_call.1} parent=1 // pred_check_branch
      %258 = sbr.rel (0) target = $region29
    $region28: #{tpu_custom_call.1} parent=1 // pred_region
      %s260 = ssub.s32 1024, 1024
      %261 = vsyncadd [#allocation4], %s260
      %s262 = sshll.u32 [#allocation8], 4
      %s263 = int_to_ptr.vmem [resolvable:$true] %s262
      %268 = dma.vmem_to_hbm [thread:$0]  %s263, 1024, %s3, [#allocation4], 128, 128, 8
    $region29: #{tpu_custom_call.1} parent=1 // pred_fallthru
      _
    // Predicated region
    $region30: #{tpu_custom_call.1} parent=1 // pred_check
      _
    $region31: #{tpu_custom_call.1} parent=1 // pred_check_branch
      %270 = sbr.rel (0) target = $region33
    $region32: #{tpu_custom_call.1} parent=1 // pred_region
      %271 = dma.done [#allocation4], 1024
    $region33: #{tpu_custom_call.1} parent=1 // pred_fallthru
      _
    %272 = vsyncpa [#allocation3], 1
    %273 = vsyncpa [#allocation6], 1
    %274 = vsyncpa [#allocation4], 1

</llo_original>
